<compile_context>
chip_gen: v7x
topology: tpu7x:2x2x1
jax: 0.10.0
libtpu: 0.0.40
codegen_flags: <defaults>
</compile_context>

<pallas_src>
import jax
import jax.numpy as jnp
from jax.experimental import pallas as pl


def _null_permutation_kernel(x_hbm_ref, o_hbm_ref):
    # True no-op. The output is aliased onto the input buffer
    # (input_output_aliases={0: 0}), so there is nothing to copy or compute:
    # zero DMAs, zero VMEM traffic, zero grid steps.
    del x_hbm_ref, o_hbm_ref


def null_permutation(x, reverse=False):
    """Optimal NullPermutation.forward: identity, no kernel, zero HBM traffic."""
    del reverse  # identity in both directions
    return x, jnp.zeros((), dtype=x.dtype)


def null_permutation_pallas(x, reverse=False):
    """NullPermutation.forward routed through a (no-op) Pallas custom call."""
    del reverse  # identity in both directions
    y = pl.pallas_call(
        _null_permutation_kernel,
        out_shape=jax.ShapeDtypeStruct(x.shape, x.dtype),
        in_specs=[pl.BlockSpec(memory_space=pl.ANY)],   # raw HBM ref, no auto-DMA
        out_specs=pl.BlockSpec(memory_space=pl.ANY),    # raw HBM ref, no auto-DMA
        input_output_aliases={0: 0},                    # output buffer == input buffer
        cost_estimate=pl.CostEstimate(
            flops=0, transcendentals=0, bytes_accessed=0),
    )(x)
    return y, jnp.zeros((), dtype=x.dtype)


if __name__ == "__main__":
    key = jax.random.PRNGKey(0)

    # Small NCHW input consistent with a flow-style module.
    x = jax.random.normal(key, (2, 4, 16, 16), dtype=jnp.float32)

    # Preferred (no-kernel) path.
    y, logdet = null_permutation(x)
    jax.block_until_ready(y)
    assert y.shape == x.shape and y.dtype == x.dtype
    assert jnp.array_equal(y, x)
    assert float(logdet) == 0.0

    # Pallas no-op path (non-donated call: output still equals x).
    y_p, logdet_p = null_permutation_pallas(x)
    jax.block_until_ready(y_p)
    jax.block_until_ready(logdet_p)
    assert y_p.shape == x.shape and y_p.dtype == x.dtype
    assert jnp.array_equal(y_p, x)
    assert float(logdet_p) == 0.0

    # reverse path has identical semantics (flag intentionally ignored).
    y_rev, logdet_rev = null_permutation_pallas(x, reverse=True)
    jax.block_until_ready(y_rev)
    assert jnp.array_equal(y_rev, x)
    assert float(logdet_rev) == 0.0

    # Odd-sized (non-128-multiple) and non-f32 input: the ANY-memory-space no-op
    # has no tiling/layout constraints, so it takes exactly the same path.
    x_odd = jax.random.normal(jax.random.PRNGKey(1), (3, 5, 7), dtype=jnp.bfloat16)
    y_odd, logdet_odd = null_permutation_pallas(x_odd)
    jax.block_until_ready(y_odd)
    assert y_odd.dtype == x_odd.dtype
    assert jnp.array_equal(y_odd, x_odd)
    assert float(logdet_odd) == 0.0

    # Donated-under-jit path: fully zero-copy (output buffer aliases input buffer).
    x_big = jax.random.normal(key, (2, 4, 512, 256), dtype=jnp.float32)
    x_big_ref = x_big + 0.0  # independent copy for the correctness check
    donated = jax.jit(null_permutation_pallas, donate_argnums=0)
    y_big, logdet_big = donated(x_big)
    jax.block_until_ready(y_big)
    assert jnp.array_equal(y_big, x_big_ref)
    assert float(logdet_big) == 0.0

    print("KERNEL_OK")
</pallas_src>

<mosaic_0001>
module attributes {stable_mosaic.version = 11 : i64} {
  func.func @_null_permutation_kernel(%arg0: memref<2x4x16x16xf32, #tpu.memory_space<any>>, %arg1: memref<2x4x16x16xf32, #tpu.memory_space<any>>) attributes {dimension_semantics = [], scalar_prefetch = 0 : i64, scratch_operands = 0 : i64, tpu.core_type = #tpu.core_type<tc>} {
    return
  }
}

</mosaic_0001>

<llo_original>
// kernel: tpu_custom_call.1
$region0: #{tpu_custom_call.1}
  #allocation0 [shape = 'u32[]', space=smem, size = 0x4, offset = 0x4, fixed_abs, tag = 'smem constant byte address 0x4 - core index']
  #allocation1 [shape = 'u32[144,128]{1,0:T(1,128)}', space=vmem, size = 0x12000, scoped, tag = 'internal scratch']
  %s0 = inlined_call_operand.hbm [shape: f32[2,4,16,16], index: 0, kind: input, shape index: {}, may-alias: {0,1}]
  %s1 = inlined_call_operand.hbm [shape: f32[2,4,16,16], index: 1, kind: output, shape index: {}, may-alias: {0,1}]
  %s2 = sld [smem:[#allocation0]]
  $region2: #{tpu_custom_call.1} parent=0
    _
  %s4 = ssub.s32 1, %s2
  %s5 = scalar_select 0, %s4, %s2

</llo_original>
